<compile_context>
chip_gen: v7x
topology: tpu7x:2x2x1
jax: 0.10.0
libtpu: 0.0.40
codegen_flags: <defaults>
</compile_context>

<pallas_src>
import functools

import jax
import jax.numpy as jnp
from jax.experimental import pallas as pl
from jax.experimental.pallas import tpu as pltpu


def _round_up(x: int, m: int) -> int:
    return ((x + m - 1) // m) * m


# --------------------- primary kernel: weight VMEM-resident ---------------------
def _linear_kernel_resident(x_ref, w_ref, b_ref, o_ref, acc_ref, *, tk):
    # x_ref: (tm, tk) streamed    w_ref: (Dp, Cp) resident    b_ref: (1, Cp) f32
    # o_ref: (tm, Cp)             acc_ref: (tm, Cp) f32
    k = pl.program_id(1)

    @pl.when(k == 0)
    def _():
        # Init accumulator with the bias (saves an add in the finalize branch).
        acc_ref[...] = jnp.broadcast_to(b_ref[...], acc_ref.shape)

    off = pl.multiple_of(k * tk, tk)  # aligned sublane offset into resident W
    acc_ref[...] += jnp.dot(
        x_ref[...], w_ref[pl.ds(off, tk), :], preferred_element_type=jnp.float32
    )

    @pl.when(k == pl.num_programs(1) - 1)
    def _():
        o_ref[...] = acc_ref[...].astype(o_ref.dtype)


# --------------------- fallback kernel: K/N-tiled weight ------------------------
def _linear_kernel_tiled(x_ref, w_ref, b_ref, o_ref, acc_ref):
    # x_ref: (tm, tk)  w_ref: (tk, tn)  b_ref: (1, tn)  o_ref: (tm, tn)  acc: f32
    k = pl.program_id(2)

    @pl.when(k == 0)
    def _():
        acc_ref[...] = jnp.broadcast_to(b_ref[...], acc_ref.shape)

    acc_ref[...] += jnp.dot(x_ref[...], w_ref[...], preferred_element_type=jnp.float32)

    @pl.when(k == pl.num_programs(2) - 1)
    def _():
        o_ref[...] = acc_ref[...].astype(o_ref.dtype)


def regression_head(features, weight, bias, *, mxu_dtype=jnp.bfloat16,
                    tm=None, tk=None, vmem_budget_bytes=40 * (1 << 20)):
    """features: [B, D]; weight: [C, D] (PyTorch Linear layout); bias: [C] -> [B, C]."""
    B, D = features.shape
    C, D_w = weight.shape
    assert D == D_w and bias.shape == (C,)

    out_dtype = features.dtype
    if mxu_dtype is not None:
        # NOTE: this is an extra HBM pass over x; prefer upstream bf16 activations.
        features = features.astype(mxu_dtype)
        weight = weight.astype(mxu_dtype)

    x_item = features.dtype.itemsize
    w_item = weight.dtype.itemsize
    o_item = jnp.dtype(out_dtype).itemsize
    sub = 16 if features.dtype == jnp.bfloat16 else 8

    # ---- M tiling: big tiles, but give v7x's two TensorCores >=2 M blocks. ----
    if tm is None:
        tm = min(_round_up(B, sub), 512)
        if B > sub and _round_up(B, tm) // tm < 2:
            tm = _round_up((B + 1) // 2, sub)
    Bp = _round_up(B, tm)

    Cp = _round_up(C, 128)  # lane-dense output (>=128-wide unmasked stores)

    # ---- K tiling: as big as fits; pick resident-W path when W fits VMEM. ----
    tk_max = min(_round_up(D, 128), 2048)
    tk_candidates = [tk] if tk is not None else sorted(
        {t for t in (tk_max, 1024, 512, 256, 128) if t <= tk_max}, reverse=True)

    use_resident, vmem_need, Dp = False, 0, None
    for tk_ in tk_candidates:
        Dp_ = _round_up(D, tk_)
        need = (2 * Dp_ * Cp * w_item     # resident W (worst case double-buffered)
                + 2 * tm * tk_ * x_item   # x double buffer
                + 2 * tm * Cp * o_item    # output double buffer
                + tm * Cp * 4             # f32 accumulator
                + 2 * Cp * 4)             # bias
        if need <= vmem_budget_bytes:
            use_resident, tk, Dp, vmem_need = True, tk_, Dp_, need
            break
    if not use_resident:
        tk = tk if tk is not None else tk_max
        Dp = _round_up(D, tk)

    if use_resident:
        tn = Cp
    else:
        tn = min(Cp, 512)
        Cp = _round_up(C, tn)

    # Pre-transpose the weight ONCE to [D, C] (constant-foldable for inference
    # weights) so the kernel contraction is the canonical lane-dense form.
    wt = weight.T

    xp = features if (Bp == B and Dp == D) else jnp.pad(features, ((0, Bp - B), (0, Dp - D)))
    wtp = wt if (Dp == D and Cp == C) else jnp.pad(wt, ((0, Dp - D), (0, Cp - C)))
    b2d = (bias if Cp == C else jnp.pad(bias, (0, Cp - C))).reshape(1, Cp).astype(jnp.float32)

    cost = pl.CostEstimate(
        flops=2 * B * D * C,
        transcendentals=0,
        bytes_accessed=xp.size * x_item + wtp.size * w_item + b2d.size * 4 + Bp * Cp * o_item,
    )

    if use_resident:
        vmem_limit = int(min(max(vmem_need + (8 << 20), 32 << 20), 48 << 20))
        out_padded = pl.pallas_call(
            functools.partial(_linear_kernel_resident, tk=tk),
            out_shape=jax.ShapeDtypeStruct((Bp, Cp), out_dtype),
            grid_spec=pltpu.PrefetchScalarGridSpec(
                num_scalar_prefetch=0,
                grid=(Bp // tm, Dp // tk),
                in_specs=[
                    pl.BlockSpec((tm, tk), lambda i, k: (i, k)),   # x tile (streamed)
                    pl.BlockSpec((Dp, Cp), lambda i, k: (0, 0)),   # W: fetched once, resident
                    pl.BlockSpec((1, Cp), lambda i, k: (0, 0)),    # bias: resident
                ],
                out_specs=pl.BlockSpec((tm, Cp), lambda i, k: (i, 0)),
                scratch_shapes=[pltpu.VMEM((tm, Cp), jnp.float32)],
            ),
            compiler_params=pltpu.CompilerParams(
                dimension_semantics=("parallel", "arbitrary"),
                vmem_limit_bytes=vmem_limit,
            ),
            cost_estimate=cost,
        )(xp, wtp, b2d)
    else:
        # Fallback for very large C*D: canonical 3-axis grid, reduction axis last.
        out_padded = pl.pallas_call(
            _linear_kernel_tiled,
            out_shape=jax.ShapeDtypeStruct((Bp, Cp), out_dtype),
            grid_spec=pltpu.PrefetchScalarGridSpec(
                num_scalar_prefetch=0,
                grid=(Bp // tm, Cp // tn, Dp // tk),
                in_specs=[
                    pl.BlockSpec((tm, tk), lambda i, j, k: (i, k)),
                    pl.BlockSpec((tk, tn), lambda i, j, k: (k, j)),   # pre-transposed W
                    pl.BlockSpec((1, tn), lambda i, j, k: (0, j)),
                ],
                out_specs=pl.BlockSpec((tm, tn), lambda i, j, k: (i, j)),
                scratch_shapes=[pltpu.VMEM((tm, tn), jnp.float32)],
            ),
            compiler_params=pltpu.CompilerParams(
                dimension_semantics=("parallel", "parallel", "arbitrary"),
            ),
            cost_estimate=cost,
        )(xp, wtp, b2d)

    return out_padded[:B, :C]


if __name__ == "__main__":
    # Small shapes consistent with the module: batch=2, input_size=32, num_classes=4.
    batch, input_size, num_classes = 2, 32, 4

    key = jax.random.PRNGKey(0)
    k_x, k_w, k_b = jax.random.split(key, 3)

    features = jax.random.normal(k_x, (batch, input_size), dtype=jnp.float32)
    bound = 1.0 / (input_size ** 0.5)   # mimics nn.Linear's uniform init range
    weight = jax.random.uniform(k_w, (num_classes, input_size),
                                minval=-bound, maxval=bound, dtype=jnp.float32)
    bias = jax.random.uniform(k_b, (num_classes,),
                              minval=-bound, maxval=bound, dtype=jnp.float32)

    ref_f32 = jnp.dot(features, weight.T, precision=jax.lax.Precision.HIGHEST) + bias

    # 1) f32 operands (exact path), resident-weight kernel: tight check.
    out_f32 = jax.block_until_ready(regression_head(features, weight, bias, mxu_dtype=None))
    assert out_f32.shape == (batch, num_classes)
    assert jnp.allclose(out_f32, ref_f32, atol=1e-4, rtol=1e-4)

    # 2) Default path (bf16 operands on the MXU, f32 accumulation): check vs bf16 reference.
    out_bf16 = jax.block_until_ready(regression_head(features, weight, bias))
    ref_bf16 = jnp.dot(features.astype(jnp.bfloat16).astype(jnp.float32),
                       weight.astype(jnp.bfloat16).astype(jnp.float32).T,
                       precision=jax.lax.Precision.HIGHEST) + bias
    assert out_bf16.shape == (batch, num_classes)
    assert jnp.allclose(out_bf16, ref_bf16, atol=3e-2, rtol=3e-2)

    # 3) Force the K/N-tiled fallback path (vmem_budget_bytes=0) to validate it too.
    out_tiled = jax.block_until_ready(
        regression_head(features, weight, bias, mxu_dtype=None, vmem_budget_bytes=0))
    assert jnp.allclose(out_tiled, ref_f32, atol=1e-4, rtol=1e-4)

    print("KERNEL_OK")
</pallas_src>

<mosaic_0001>
module attributes {stable_mosaic.version = 11 : i64} {
  func.func @_linear_kernel_resident(%arg0: i32, %arg1: i32, %arg2: memref<8x128xf32, #tpu.memory_space<vmem>>, %arg3: memref<128x128xf32, #tpu.memory_space<vmem>>, %arg4: memref<1x128xf32, #tpu.memory_space<vmem>>, %arg5: memref<8x128xf32, #tpu.memory_space<vmem>>, %arg6: memref<8x128xf32, #tpu.memory_space<vmem>>) attributes {dimension_semantics = [#tpu.dimension_semantics<parallel>, #tpu.dimension_semantics<arbitrary>], iteration_bounds = array<i64: 1, 1>, scalar_prefetch = 0 : i64, scratch_operands = 1 : i64, tpu.core_type = #tpu.core_type<tc>, window_params = [{transform_indices = @transform_0, window_bounds = array<i64: 8, 128>}, {pipeline_mode = #tpu.pipeline_mode<synchronous>, transform_indices = @transform_1, window_bounds = array<i64: 128, 128>}, {pipeline_mode = #tpu.pipeline_mode<synchronous>, transform_indices = @transform_2, window_bounds = array<i64: 1, 128>}, {transform_indices = @transform_3, window_bounds = array<i64: 8, 128>}]} {
    %c0_i32 = arith.constant 0 : i32
    %0 = arith.cmpi eq, %arg1, %c0_i32 : i32
    %1 = arith.extui %0 : i1 to i32
    %c0_i32_0 = arith.constant 0 : i32
    %2 = arith.cmpi ne, %1, %c0_i32_0 : i32
    scf.if %2 {
      %c0_9 = arith.constant 0 : index
      %c0_10 = arith.constant 0 : index
      %15 = vector.load %arg4[%c0_9, %c0_10] : memref<1x128xf32, #tpu.memory_space<vmem>>, vector<1x128xf32>
      %16 = vector.shape_cast %15 : vector<1x128xf32> to vector<1x128xf32>
      %17 = vector.broadcast %16 : vector<1x128xf32> to vector<8x128xf32>
      %c0_11 = arith.constant 0 : index
      %c0_12 = arith.constant 0 : index
      %18 = vector.load %arg6[%c0_11, %c0_12] : memref<8x128xf32, #tpu.memory_space<vmem>>, vector<8x128xf32>
      tpu.vector_store %arg6[%c0_11, %c0_12], %17 {strides = array<i32>} : memref<8x128xf32, #tpu.memory_space<vmem>>, vector<8x128xf32>,
    } else {
    }
    %c128_i32 = arith.constant 128 : i32
    %3 = arith.muli %arg1, %c128_i32 : i32
    %4 = tpu.assume_multiple %3, 128 : i32
    %c0 = arith.constant 0 : index
    %c0_1 = arith.constant 0 : index
    %5 = vector.load %arg6[%c0, %c0_1] : memref<8x128xf32, #tpu.memory_space<vmem>>, vector<8x128xf32>
    %c0_2 = arith.constant 0 : index
    %c0_3 = arith.constant 0 : index
    %6 = vector.load %arg2[%c0_2, %c0_3] : memref<8x128xf32, #tpu.memory_space<vmem>>, vector<8x128xf32>
    %7 = arith.index_cast %4 : i32 to index
    %c0_4 = arith.constant 0 : index
    %8 = vector.load %arg3[%7, %c0_4] : memref<128x128xf32, #tpu.memory_space<vmem>>, vector<128x128xf32>
    %cst = arith.constant dense<0.000000e+00> : vector<8x128xf32>
    %9 = tpu.matmul %6, %8, %cst {dimension_numbers = #tpu.dot_dimension_numbers<[1], [0], [0], [1], [0, 0, 1, 1], [], []>} : vector<8x128xf32>, vector<128x128xf32>, vector<8x128xf32> -> vector<8x128xf32>
    %10 = arith.addf %5, %9 : vector<8x128xf32>
    %c0_5 = arith.constant 0 : index
    %c0_6 = arith.constant 0 : index
    %11 = vector.load %arg6[%c0_5, %c0_6] : memref<8x128xf32, #tpu.memory_space<vmem>>, vector<8x128xf32>
    tpu.vector_store %arg6[%c0_5, %c0_6], %10 {strides = array<i32>} : memref<8x128xf32, #tpu.memory_space<vmem>>, vector<8x128xf32>,
    %c0_i32_7 = arith.constant 0 : i32
    %12 = arith.cmpi eq, %arg1, %c0_i32_7 : i32
    %13 = arith.extui %12 : i1 to i32
    %c0_i32_8 = arith.constant 0 : i32
    %14 = arith.cmpi ne, %13, %c0_i32_8 : i32
    scf.if %14 {
      %c0_9 = arith.constant 0 : index
      %c0_10 = arith.constant 0 : index
      %15 = vector.load %arg6[%c0_9, %c0_10] : memref<8x128xf32, #tpu.memory_space<vmem>>, vector<8x128xf32>
      %c0_11 = arith.constant 0 : index
      %c0_12 = arith.constant 0 : index
      %16 = vector.load %arg5[%c0_11, %c0_12] : memref<8x128xf32, #tpu.memory_space<vmem>>, vector<8x128xf32>
      tpu.vector_store %arg5[%c0_11, %c0_12], %15 {strides = array<i32>} : memref<8x128xf32, #tpu.memory_space<vmem>>, vector<8x128xf32>,
    } else {
    }
    return
  }
  func.func @transform_0(%arg0: i32, %arg1: i32) -> (i32, i32) {
    %c0_i32 = arith.constant 0 : i32
    return %arg0, %arg1 : i32, i32
  }
  func.func @transform_1(%arg0: i32, %arg1: i32) -> (i32, i32) {
    %c0_i32 = arith.constant 0 : i32
    %c0_i32_0 = arith.constant 0 : i32
    %c0_i32_1 = arith.constant 0 : i32
    return %c0_i32, %c0_i32_0 : i32, i32
  }
  func.func @transform_2(%arg0: i32, %arg1: i32) -> (i32, i32) {
    %c0_i32 = arith.constant 0 : i32
    %c0_i32_0 = arith.constant 0 : i32
    %c0_i32_1 = arith.constant 0 : i32
    return %c0_i32, %c0_i32_0 : i32, i32
  }
  func.func @transform_3(%arg0: i32, %arg1: i32) -> (i32, i32) {
    %c0_i32 = arith.constant 0 : i32
    %c0_i32_0 = arith.constant 0 : i32
    return %arg0, %c0_i32 : i32, i32
  }
}

</mosaic_0001>

<llo_original>
// kernel: tpu_custom_call.1
$region0: #{tpu_custom_call.1}
  #allocation0 [shape = 'u32[]', space=smem, size = 0x4, offset = 0x4, fixed_abs, tag = 'smem constant byte address 0x4 - core index']
  #allocation1 [shape = 'u32[144,128]{1,0:T(1,128)}', space=vmem, size = 0x12000, scoped, tag = 'internal scratch']
  #allocation2 [shape = 'f32[8,128]{1,0:T(8,128)}', space=vmem, size = 0x1000, scoped, tag = 'scratch operand']
  %s0 = inlined_call_operand.hbm [shape: f32[8,128], index: 0, kind: input, shape index: {}]
  %s1 = inlined_call_operand.hbm [shape: f32[128,128], index: 1, kind: input, shape index: {}]
  %s2 = inlined_call_operand.vmem [shape: f32[1,128], index: 2, kind: input, shape index: {}]
  %s3 = inlined_call_operand.hbm [shape: f32[8,128], index: 3, kind: output, shape index: {}]
  %s4 = sld [smem:[#allocation0]]
  $region38: #{tpu_custom_call.1} parent=0
    _
  %s6 = ssub.s32 1, %s4
  %s7 = scalar_select 0, %s6, %s4
  $region1: #{tpu_custom_call.1} parent=0
    #allocation3 [shape = 'u8[4096]{0}', space=vmem, size = 0x1000, scoped, tag = 'input window, operand 0, single buffered']
    #allocation4 [shape = 's32[1]{0}', space=sflag, size = 0x4, scoped, tag = 'scoped memory for tpu_custom_call.1']
    #allocation5 [shape = 's32[1]{0}', space=sflag, size = 0x4, scoped, tag = 'scoped memory for tpu_custom_call.1']
    #allocation6 [shape = 'u8[65536]{0}', space=vmem, size = 0x10000, scoped, tag = 'input window, operand 1, single buffered']
    #allocation7 [shape = 's32[1]{0}', space=sflag, size = 0x4, scoped, tag = 'scoped memory for tpu_custom_call.1']
    #allocation8 [shape = 'u8[4096]{0}', space=vmem, size = 0x1000, scoped, tag = 'output window, operand 0, single buffered']
    %8 = vsyncpa [#allocation4], 0
    %9 = vsyncpa [#allocation7], 0
    %10 = vsyncpa [#allocation5], 0
    // Predicated region
    $region2: #{tpu_custom_call.1} parent=1 // pred_check
      _
    $region3: #{tpu_custom_call.1} parent=1 // pred_check_branch
      %12 = sbr.rel (0) target = $region5
    $region4: #{tpu_custom_call.1} parent=1 // pred_region
      %s14 = ssub.s32 128, 128
      %15 = vsyncadd [#allocation4], %s14
      %s17 = sshll.u32 [#allocation3], 4
      %s18 = int_to_ptr.vmem [resolvable:$true] %s17
      %20 = dma.hbm_to_vmem [thread:$0]  %s0, 128, %s18, [#allocation4]
    $region5: #{tpu_custom_call.1} parent=1 // pred_fallthru
      _
    // Predicated region
    $region6: #{tpu_custom_call.1} parent=1 // pred_check
      _
    $region7: #{tpu_custom_call.1} parent=1 // pred_check_branch
      %22 = sbr.rel (0) target = $region9
    $region8: #{tpu_custom_call.1} parent=1 // pred_region
      %s24 = ssub.s32 2048, 2048
      %25 = vsyncadd [#allocation7], %s24
      %s26 = sshll.u32 [#allocation6], 4
      %s27 = int_to_ptr.vmem [resolvable:$true] %s26
      %32 = dma.hbm_to_vmem [thread:$0]  %s1, 2048, %s27, [#allocation7], 128, 128, 8
    $region9: #{tpu_custom_call.1} parent=1 // pred_fallthru
      _
    // Predicated region
    $region10: #{tpu_custom_call.1} parent=1 // pred_check
      _
    $region11: #{tpu_custom_call.1} parent=1 // pred_check_branch
      %34 = sbr.rel (0) target = $region13
    $region12: #{tpu_custom_call.1} parent=1 // pred_region
      _
    $region13: #{tpu_custom_call.1} parent=1 // pred_fallthru
      _
    // Predicated region
    $region14: #{tpu_custom_call.1} parent=1 // pred_check
      _
    $region15: #{tpu_custom_call.1} parent=1 // pred_check_branch
      %36 = sbr.rel (0) target = $region17
    $region16: #{tpu_custom_call.1} parent=1 // pred_region
      %37 = dma.done [#allocation4], 128
    $region17: #{tpu_custom_call.1} parent=1 // pred_fallthru
      _
    // Predicated region
    $region18: #{tpu_custom_call.1} parent=1 // pred_check
      _
    $region19: #{tpu_custom_call.1} parent=1 // pred_check_branch
      %39 = sbr.rel (0) target = $region21
    $region20: #{tpu_custom_call.1} parent=1 // pred_region
      %40 = dma.done [#allocation7], 2048
    $region21: #{tpu_custom_call.1} parent=1 // pred_fallthru
      _
    %p41 = scmp.eq.s32.totalorder 0, 0
    // Predicated region
    $region22: #{tpu_custom_call.1} parent=1 // pred_check
      %p42 = pneg %p41
    $region23: #{tpu_custom_call.1} parent=1 // pred_check_branch
      %44 = sbr.rel (%p42) target = $region25
    $region24: #{tpu_custom_call.1} parent=1 // pred_region
      %v45 = vld [vmem:[%s2] sm:$0x1]
      %v47 = vlaneseq
      %v48 = vshrl.u32 %v47, 7
      %v49 = vsub.s32 0, %v48
      %v50 = vrot.slane %v45, %v49
      %52 = vst [vmem:[#allocation2] sm:$0xff] %v50
    $region25: #{tpu_custom_call.1} parent=1 // pred_fallthru
      _
    %s53 = smul.u32 0, 128
    %v54 = vld [vmem:[#allocation2] sm:$0xff]
    %v55 = vld [vmem:[#allocation3] sm:$0xff]
    %s56 = scalar_lea.vmem [#allocation6], %s53
    %v57 = vld [vmem:[%s56] sm:$0xff]
    %v58 = vld [vmem:[%s56 + $0x8] sm:$0xff]
    %v59 = vld [vmem:[%s56 + $0x10] sm:$0xff]
    %v60 = vld [vmem:[%s56 + $0x18] sm:$0xff]
    %v61 = vld [vmem:[%s56 + $0x20] sm:$0xff]
    %v62 = vld [vmem:[%s56 + $0x28] sm:$0xff]
    %v63 = vld [vmem:[%s56 + $0x30] sm:$0xff]
    %v64 = vld [vmem:[%s56 + $0x38] sm:$0xff]
    %v65 = vld [vmem:[%s56 + $0x40] sm:$0xff]
    %v66 = vld [vmem:[%s56 + $0x48] sm:$0xff]
    %v67 = vld [vmem:[%s56 + $0x50] sm:$0xff]
    %v68 = vld [vmem:[%s56 + $0x58] sm:$0xff]
    %v69 = vld [vmem:[%s56 + $0x60] sm:$0xff]
    %v70 = vld [vmem:[%s56 + $0x68] sm:$0xff]
    %v71 = vld [vmem:[%s56 + $0x70] sm:$0xff]
    %v72 = vld [vmem:[%s56 + $0x78] sm:$0xff]
    %73 = vmatprep.subr.mxu0 0.0
    %74 = vmatpush1.msra.mxu0 %v57
    %75 = vmatprep.subr.mxu0 0.0
    %76 = vmatpush1.msra.mxu0 %v58
    %77 = vmatprep.subr.mxu0 0.0
    %78 = vmatpush1.msra.mxu0 %v59
    %79 = vmatprep.subr.mxu0 0.0
    %80 = vmatpush1.msra.mxu0 %v60
    %81 = vmatprep.subr.mxu0 0.0
    %82 = vmatpush1.msra.mxu0 %v61
    %83 = vmatprep.subr.mxu0 0.0
    %84 = vmatpush1.msra.mxu0 %v62
    %85 = vmatprep.subr.mxu0 0.0
    %86 = vmatpush1.msra.mxu0 %v63
    %87 = vmatprep.subr.mxu0 0.0
    %88 = vmatpush1.msra.mxu0 %v64
    %89 = vmatprep.subr.mxu0 0.0
    %90 = vmatpush1.msra.mxu0 %v65
    %91 = vmatprep.subr.mxu0 0.0
    %92 = vmatpush1.msra.mxu0 %v66
    %93 = vmatprep.subr.mxu0 0.0
    %94 = vmatpush1.msra.mxu0 %v67
    %95 = vmatprep.subr.mxu0 0.0
    %96 = vmatpush1.msra.mxu0 %v68
    %97 = vmatprep.subr.mxu0 0.0
    %98 = vmatpush1.msra.mxu0 %v69
    %99 = vmatprep.subr.mxu0 0.0
    %100 = vmatpush1.msra.mxu0 %v70
    %101 = vmatprep.subr.mxu0 0.0
    %102 = vmatpush1.msra.mxu0 %v71
    %103 = vmatprep.subr.mxu0 0.0
    %104 = vmatpush1.msra.mxu0 %v72
    %105 = vmatprep.subr.mxu0 0.0
    %106 = vmatpush1.msra.mxu0 0.0
    %107 = vmatprep.subr.mxu0 0.0
    %108 = vmatpush1.msra.mxu0 0.0
    %109 = vmatprep.subr.mxu0 0.0
    %110 = vmatpush1.msra.mxu0 0.0
    %111 = vmatprep.subr.mxu0 0.0
    %112 = vmatpush1.msra.mxu0 0.0
    %113 = vmatprep.subr.mxu0 0.0
    %114 = vmatpush1.msra.mxu0 0.0
    %115 = vmatprep.subr.mxu0 0.0
    %116 = vmatpush1.msra.mxu0 0.0
    %117 = vmatprep.subr.mxu0 0.0
    %118 = vmatpush1.msra.mxu0 0.0
    %119 = vmatprep.subr.mxu0 0.0
    %120 = vmatpush1.msra.mxu0 0.0
    %121 = vmatprep.subr.mxu0 0.0
    %122 = vmatpush1.msra.mxu0 0.0
    %123 = vmatprep.subr.mxu0 0.0
    %124 = vmatpush1.msra.mxu0 0.0
    %125 = vmatprep.subr.mxu0 0.0
    %126 = vmatpush1.msra.mxu0 0.0
    %127 = vmatprep.subr.mxu0 0.0
    %128 = vmatpush1.msra.mxu0 0.0
    %129 = vmatprep.subr.mxu0 0.0
    %130 = vmatpush1.msra.mxu0 0.0
    %131 = vmatprep.subr.mxu0 0.0
    %132 = vmatpush1.msra.mxu0 0.0
    %133 = vmatprep.subr.mxu0 0.0
    %134 = vmatpush1.msra.mxu0 0.0
    %135 = vmatprep.subr.mxu0 0.0
    %136 = vmatpush1.msra.mxu0 0.0
    %137 = vmatprep.mubr.f32.mxu0 0.0
    %138 = vmatmul.mubr.f32.gmra.mrb[0].mxu0 %v55
    %v139 = vpop.f32.mrb[0].mxu0
    %v140 = vadd.f32 0.0, %v139
    %v141 = vpop.f32.mrb[0].mxu0
    %142 = vdwg.mxu0
    %v143 = vadd.f32 %v54, %v140
    %144 = vst [vmem:[#allocation2] sm:$0xff] %v143
    // Predicated region
    $region26: #{tpu_custom_call.1} parent=1 // pred_check
      %p145 = pneg %p41
    $region27: #{tpu_custom_call.1} parent=1 // pred_check_branch
      %147 = sbr.rel (%p145) target = $region29
    $region28: #{tpu_custom_call.1} parent=1 // pred_region
      %v148 = vld [vmem:[#allocation2] sm:$0xff]
      %149 = vst [vmem:[#allocation8] sm:$0xff] %v148
    $region29: #{tpu_custom_call.1} parent=1 // pred_fallthru
      _
    // Predicated region
    $region30: #{tpu_custom_call.1} parent=1 // pred_check
      _
    $region31: #{tpu_custom_call.1} parent=1 // pred_check_branch
      %151 = sbr.rel (0) target = $region33
    $region32: #{tpu_custom_call.1} parent=1 // pred_region
      %s153 = ssub.s32 128, 128
      %154 = vsyncadd [#allocation5], %s153
      %s156 = sshll.u32 [#allocation8], 4
      %s157 = int_to_ptr.vmem [resolvable:$true] %s156
      %159 = dma.vmem_to_hbm [thread:$0]  %s157, 128, %s3, [#allocation5]
    $region33: #{tpu_custom_call.1} parent=1 // pred_fallthru
      _
    // Predicated region
    $region34: #{tpu_custom_call.1} parent=1 // pred_check
      _
    $region35: #{tpu_custom_call.1} parent=1 // pred_check_branch
      %161 = sbr.rel (0) target = $region37
    $region36: #{tpu_custom_call.1} parent=1 // pred_region
      %162 = dma.done [#allocation5], 128
    $region37: #{tpu_custom_call.1} parent=1 // pred_fallthru
      _
    %163 = vsyncpa [#allocation4], 1
    %164 = vsyncpa [#allocation7], 1
    %165 = vsyncpa [#allocation5], 1

</llo_original>
